<compile_context>
chip_gen: v7x
topology: tpu7x:2x2x1
jax: 0.10.0
libtpu: 0.0.40
codegen_flags: <defaults>
</compile_context>

<pallas_src>
import functools
import math

import jax
import jax.numpy as jnp
from jax.experimental import pallas as pl
from jax.experimental.pallas import tpu as pltpu

LANES = 128
# ~1 MiB of f32 per logical block: measured mem-bound sweet spot (~85% of HBM
# roofline).  With double-buffered input + output that is <= 8 MiB of VMEM in
# the dense case (and well under the explicit 48 MiB limit even if Mosaic pads
# the single sublane), safe on v5e / v6e / v7x.
DEFAULT_BLOCK_COLS = 256 * 1024
VMEM_LIMIT_BYTES = 48 * 1024 * 1024


def linear_kernel(w_ref, b_ref, x_ref, o_ref):
    """y = x * w + b on a (1, block_cols) lane-major VMEM tile.

    w_ref: SMEM (1, 1) float32, b_ref: SMEM (1,) float32.  Parameters are kept
    in f32 regardless of the activation dtype; the result is cast once at the
    store.  Pure VPU FMA, no MXU.
    """
    w = w_ref[0, 0]
    b = b_ref[0]
    x = x_ref[...].astype(jnp.float32)
    o_ref[...] = (x * w + b).astype(o_ref.dtype)


def _dimension_semantics():
    # Engage both TensorCores on v7x; plain "parallel" elsewhere (measured to
    # be equivalent to "arbitrary" on single-TC v5e/v6e).
    try:
        kind = jax.devices()[0].device_kind.lower()
    except Exception:
        kind = ""
    if ("v7" in kind or "7x" in kind) and hasattr(pltpu, "CORE_PARALLEL"):
        return (pltpu.CORE_PARALLEL,)
    return ("parallel",)


@functools.partial(jax.jit, static_argnames=("max_block_cols",))
def linear_forward(x, w, b, *, max_block_cols=DEFAULT_BLOCK_COLS):
    """y = x @ w.T + b for w:(1,1), b:(1,), x:(..., 1)  — nn.Linear(1, 1)."""
    assert x.shape[-1] == 1, "LinearModel expects in_features == 1"
    assert w.shape == (1, 1) and b.shape == (1,)
    assert max_block_cols % LANES == 0

    orig_shape = x.shape
    n = math.prod(orig_shape)
    assert n >= 1
    dtype = x.dtype

    # Zero-copy lane-dense view: (..., 1) -> (1, N) is a bitcast under jit
    # (row-major contiguous), so no HBM pass is spent on padding/reshaping,
    # and the trailing reshape back is likewise free.
    x_row = x.reshape(1, n)

    if n <= max_block_cols:
        # Whole array in one block: block last-dim == array last-dim, so the
        # 128-lane divisibility rule is satisfied for any N.
        block_cols = n
    else:
        # Multiple of 128 lanes -> full-width (unmasked) stores; the ragged
        # final block (N % block_cols != 0) is masked by Pallas so padded
        # lanes never land in the output.
        block_cols = max_block_cols

    grid = (pl.cdiv(n, block_cols),)

    y_row = pl.pallas_call(
        linear_kernel,
        out_shape=jax.ShapeDtypeStruct((1, n), dtype),
        grid=grid,
        in_specs=[
            pl.BlockSpec(memory_space=pltpu.MemorySpace.SMEM),  # w (1,1) f32
            pl.BlockSpec(memory_space=pltpu.MemorySpace.SMEM),  # b (1,)  f32
            pl.BlockSpec((1, block_cols), lambda i: (0, i)),    # x tile
        ],
        out_specs=pl.BlockSpec((1, block_cols), lambda i: (0, i)),
        compiler_params=pltpu.CompilerParams(
            dimension_semantics=_dimension_semantics(),
            vmem_limit_bytes=VMEM_LIMIT_BYTES,
        ),
    )(w.astype(jnp.float32), b.astype(jnp.float32), x_row)

    return y_row.reshape(orig_shape)


if __name__ == "__main__":
    key = jax.random.PRNGKey(0)
    kx, kw, kb = jax.random.split(key, 3)

    # nn.Linear(1, 1): batch of 8 samples, 1 feature.
    batch = 8
    x = jax.random.normal(kx, (batch, 1), dtype=jnp.float32)

    # Mirrors PyTorch's U(-1, 1) init bound for fan_in = 1.
    w = jax.random.uniform(kw, (1, 1), dtype=jnp.float32, minval=-1.0, maxval=1.0)
    b = jax.random.uniform(kb, (1,), dtype=jnp.float32, minval=-1.0, maxval=1.0)

    y = linear_forward(x, w, b)
    jax.block_until_ready(y)
    y_ref = x @ w.T + b
    assert y.shape == (batch, 1)
    assert jnp.allclose(y, y_ref, atol=1e-6), "mismatch vs reference (single block)"

    # Multi-block + ragged-final-block path (grid > 1, N not a multiple of 128
    # or of the block), with a small block to keep the test light.
    n2 = 10_000
    x2 = jax.random.normal(kx, (n2, 1), dtype=jnp.float32)
    y2 = linear_forward(x2, w, b, max_block_cols=1024)
    jax.block_until_ready(y2)
    assert jnp.allclose(y2, x2 @ w.T + b, atol=1e-6), "mismatch vs reference (tiled)"

    # Arbitrary leading batch dims, as nn.Linear supports (..., 1).
    x3 = jax.random.normal(kb, (2, 3, 1), dtype=jnp.float32)
    y3 = linear_forward(x3, w, b)
    jax.block_until_ready(y3)
    assert jnp.allclose(y3, x3 * w[0, 0] + b[0], atol=1e-6), "mismatch (nd batch)"

    print("KERNEL_OK")
</pallas_src>

<mosaic_0001>
module attributes {stable_mosaic.version = 11 : i64} {
  func.func @linear_kernel(%arg0: i32, %arg1: memref<1x1xf32, #tpu.memory_space<smem>>, %arg2: memref<1xf32, #tpu.memory_space<smem>>, %arg3: memref<1x8xf32, #tpu.memory_space<vmem>>, %arg4: memref<1x8xf32, #tpu.memory_space<vmem>>) attributes {dimension_semantics = [#tpu.dimension_semantics<parallel>], iteration_bounds = array<i64: 1>, scalar_prefetch = 0 : i64, scratch_operands = 0 : i64, tpu.core_type = #tpu.core_type<tc>, window_params = [{transform_indices = @transform_0, window_bounds = array<i64: 1, 1>}, {transform_indices = @transform_1, window_bounds = array<i64: 1>}, {transform_indices = @transform_2, window_bounds = array<i64: 1, 8>}, {transform_indices = @transform_3, window_bounds = array<i64: 1, 8>}]} {
    %c0 = arith.constant 0 : index
    %c0_0 = arith.constant 0 : index
    %0 = memref.load %arg1[%c0, %c0_0] : memref<1x1xf32, #tpu.memory_space<smem>>
    %c0_1 = arith.constant 0 : index
    %1 = memref.load %arg2[%c0_1] : memref<1xf32, #tpu.memory_space<smem>>
    %c0_2 = arith.constant 0 : index
    %c0_3 = arith.constant 0 : index
    %2 = vector.load %arg3[%c0_2, %c0_3] : memref<1x8xf32, #tpu.memory_space<vmem>>, vector<1x8xf32>
    %3 = vector.broadcast %0 : f32 to vector<1x8xf32>
    %4 = arith.mulf %2, %3 : vector<1x8xf32>
    %5 = vector.broadcast %1 : f32 to vector<1x8xf32>
    %6 = arith.addf %4, %5 : vector<1x8xf32>
    %c0_4 = arith.constant 0 : index
    %c0_5 = arith.constant 0 : index
    %7 = vector.load %arg4[%c0_4, %c0_5] : memref<1x8xf32, #tpu.memory_space<vmem>>, vector<1x8xf32>
    tpu.vector_store %arg4[%c0_4, %c0_5], %6 {strides = array<i32>} : memref<1x8xf32, #tpu.memory_space<vmem>>, vector<1x8xf32>,
    return
  }
  func.func @transform_0(%arg0: i32) -> (i32, i32) {
    %c0_i32 = arith.constant 0 : i32
    %c0_i32_0 = arith.constant 0 : i32
    %c0_i32_1 = arith.constant 0 : i32
    return %c0_i32, %c0_i32_0 : i32, i32
  }
  func.func @transform_1(%arg0: i32) -> i32 {
    %c0_i32 = arith.constant 0 : i32
    %c0_i32_0 = arith.constant 0 : i32
    return %c0_i32 : i32
  }
  func.func @transform_2(%arg0: i32) -> (i32, i32) {
    %c0_i32 = arith.constant 0 : i32
    %c0_i32_0 = arith.constant 0 : i32
    return %c0_i32, %arg0 : i32, i32
  }
  func.func @transform_3(%arg0: i32) -> (i32, i32) {
    %c0_i32 = arith.constant 0 : i32
    %c0_i32_0 = arith.constant 0 : i32
    return %c0_i32, %arg0 : i32, i32
  }
}

</mosaic_0001>

<llo_original>
// kernel: linear_forward.1
$region0: #{linear_forward.1}
  #allocation0 [shape = 'u32[]', space=smem, size = 0x4, offset = 0x4, fixed_abs, tag = 'smem constant byte address 0x4 - core index']
  #allocation1 [shape = 'u32[144,128]{1,0:T(1,128)}', space=vmem, size = 0x12000, scoped, tag = 'internal scratch']
  #allocation2 [shape = 'f32[1,1]{1,0:T(1,128)S(6)}', space=smem, size = 0x200, scoped, tag = 'scoped memory for linear_forward.1']
  #allocation3 [shape = 'f32[1]{0:T(128)S(6)}', space=smem, size = 0x200, scoped, tag = 'scoped memory for linear_forward.1']
  %s0 = inlined_call_operand.<no memory space> [shape: f32[1,1], index: 0, kind: input, shape index: {}]
  %s1 = inlined_call_operand.<no memory space> [shape: f32[1], index: 1, kind: input, shape index: {}]
  %s2 = inlined_call_operand.vmem [shape: f32[1,8], index: 2, kind: input, shape index: {}]
  %s3 = inlined_call_operand.hbm [shape: f32[1,8], index: 3, kind: output, shape index: {}]
  %s4 = sld [smem:[#allocation0]]
  $region22: #{linear_forward.1} parent=0
    _
  %s6 = ssub.s32 1, %s4
  %s7 = scalar_select 0, %s6, %s4
  %8 = sst [smem:[#allocation2]] %s0
  %9 = sst [smem:[#allocation3]] %s1
  $region1: #{linear_forward.1} parent=0
    #allocation4 [shape = 'u8[512]{0}', space=vmem, size = 0x400, scoped, tag = 'output window, operand 0, single buffered']
    #allocation5 [shape = 's32[1]{0}', space=sflag, size = 0x4, scoped, tag = 'scoped memory for linear_forward.1']
    %10 = vsyncpa [#allocation5], 0
    // Predicated region
    $region2: #{linear_forward.1} parent=1 // pred_check
      _
    $region3: #{linear_forward.1} parent=1 // pred_check_branch
      %12 = sbr.rel (0) target = $region5
    $region4: #{linear_forward.1} parent=1 // pred_region
      _
    $region5: #{linear_forward.1} parent=1 // pred_fallthru
      _
    // Predicated region
    $region6: #{linear_forward.1} parent=1 // pred_check
      _
    $region7: #{linear_forward.1} parent=1 // pred_check_branch
      %14 = sbr.rel (0) target = $region9
    $region8: #{linear_forward.1} parent=1 // pred_region
      _
    $region9: #{linear_forward.1} parent=1 // pred_fallthru
      _
    // Predicated region
    $region10: #{linear_forward.1} parent=1 // pred_check
      _
    $region11: #{linear_forward.1} parent=1 // pred_check_branch
      %16 = sbr.rel (0) target = $region13
    $region12: #{linear_forward.1} parent=1 // pred_region
      _
    $region13: #{linear_forward.1} parent=1 // pred_fallthru
      _
    %s17 = sld [smem:[#allocation2]]
    %s18 = sld [smem:[#allocation3]]
    %v19 = vld [vmem:[%s2] sm:$0x1]
    %v20 = vstv %s17
    %v21 = vmul.f32 %v19, %v20
    %v22 = vstv %s18
    %v23 = vadd.f32 %v21, %v22
    %vm24 = vcmask 57344
    %25 = vst.msk [vmem:[#allocation4] sm:$0x1] %vm24, %v23
    // Predicated region
    $region14: #{linear_forward.1} parent=1 // pred_check
      _
    $region15: #{linear_forward.1} parent=1 // pred_check_branch
      %27 = sbr.rel (0) target = $region17
    $region16: #{linear_forward.1} parent=1 // pred_region
      %s29 = ssub.s32 16, 16
      %30 = vsyncadd [#allocation5], %s29
      %s32 = sshll.u32 [#allocation4], 4
      %s33 = int_to_ptr.vmem [resolvable:$true] %s32
      %35 = dma.vmem_to_hbm [thread:$0]  %s33, 16, %s3, [#allocation5]
    $region17: #{linear_forward.1} parent=1 // pred_fallthru
      _
    // Predicated region
    $region18: #{linear_forward.1} parent=1 // pred_check
      _
    $region19: #{linear_forward.1} parent=1 // pred_check_branch
      %37 = sbr.rel (0) target = $region21
    $region20: #{linear_forward.1} parent=1 // pred_region
      %38 = dma.done [#allocation5], 16
    $region21: #{linear_forward.1} parent=1 // pred_fallthru
      _
    %39 = vsyncpa [#allocation5], 1

</llo_original>
